<compile_context>
chip_gen: v6e
topology: v6e:2x2x1
jax: 0.10.0
libtpu: 0.0.40
codegen_flags: <defaults>
</compile_context>

<pallas_src>
import functools

import jax
import jax.numpy as jnp
from jax.experimental import pallas as pl
from jax.experimental.pallas import tpu as pltpu


def _knn_loss_kernel(logits_ref, targets_ref, out_ref, denom_ref, picked_ref,
                     *, n_rows, n_cls, tile_n, tile_c):
    # logits_ref : [tile_n, tile_c] native dtype (VMEM, pipelined)
    # targets_ref: [tile_n, 1]      int32        (VMEM)
    # out_ref    : [1, 8, 128]      float32      (per-row-tile partial sum)
    # denom_ref  : [tile_n, 1]      float32 scratch (running row sum)
    # picked_ref : [tile_n, 1]      float32 scratch (running target logit)
    i = pl.program_id(0)
    j = pl.program_id(1)

    @pl.when(j == 0)
    def _init():
        denom_ref[...] = jnp.zeros_like(denom_ref)
        picked_ref[...] = jnp.zeros_like(picked_ref)

    logits = logits_ref[...].astype(jnp.float32)                      # [T, Tc]
    # Global class index of every column in this block.
    cls = j * tile_c + jax.lax.broadcasted_iota(jnp.int32, logits.shape, 1)
    if n_cls % tile_c != 0:
        # Ragged trailing class block: zero the padded (unspecified) columns.
        logits = jnp.where(cls < n_cls, logits, 0.0)

    tgt = targets_ref[...]                                            # [T, 1]
    denom_ref[...] += jnp.sum(logits, axis=-1, keepdims=True)         # [T, 1]
    # One-hot gather of logits[r, targets[r]] (no dynamic gather needed).
    picked_ref[...] += jnp.sum(jnp.where(cls == tgt, logits, 0.0),
                               axis=-1, keepdims=True)                # [T, 1]

    @pl.when(j == pl.num_programs(1) - 1)
    def _finalize():
        # max(log(picked / denom), -100): one transcendental per row; exact
        # analogue of clamp(log(p), min=-100) in the reference (also valid
        # when picked and denom are both negative).
        logp = jnp.maximum(jnp.log(picked_ref[...] / denom_ref[...]), -100.0)
        if n_rows % tile_n != 0:
            # Ragged trailing row block: padded rows contribute 0 (select, so
            # NaN/-inf from garbage rows cannot poison the sum).
            rows = i * tile_n + jax.lax.broadcasted_iota(jnp.int32,
                                                         logp.shape, 0)
            logp = jnp.where(rows < n_rows, logp, 0.0)
        partial = jnp.sum(logp, axis=0, keepdims=True)                # [1, 1]
        # Lane-dense (8,128) store of this tile's partial sum.
        out_ref[...] = jnp.broadcast_to(partial, out_ref.shape)


def knn_loss_pallas(knn_logits, targets, *, tile_n=None, tile_c=None):
    """knn_logits: [N, C] float (any dtype), targets: [N] int -> f32 scalar."""
    N, C = knn_logits.shape
    targets2d = targets.reshape(N, 1).astype(jnp.int32)

    itemsize = jnp.dtype(knn_logits.dtype).itemsize
    n_rows_ceil = -(-N // 8) * 8

    # --- class (lane) tiling: only for very wide class dims -----------------
    if tile_c is None:
        if C * itemsize <= 1024 * 1024:          # one row of logits <= 1 MiB
            tile_c = C                           # no class tiling
        else:
            # ~2 MiB of native-dtype logits per 8-row slab.
            tile_c = (262144 // itemsize) // 128 * 128
    if tile_c != C:
        tile_c = max(128, (int(tile_c) // 128) * 128)   # keep last dim legal
        tile_c = min(tile_c, -(-C // 128) * 128)

    # --- row (sublane) tiling: size the block by bytes ----------------------
    if tile_n is None:
        c_vmem = -(-tile_c // 128) * 128         # lane-padded block width
        # Per-row VMEM cost: native block (double-buffered) + f32 upcast +
        # ~3 KiB of lane-sparse [T, 1] intermediates (denom/picked/logp/tgt).
        per_row_vmem = 2 * c_vmem * itemsize + c_vmem * 4 + 3072
        rows_by_vmem = (16 * 1024 * 1024) // per_row_vmem   # ~16 MiB/step
        rows_by_hbm = (4 * 1024 * 1024) // max(1, tile_c * itemsize)
        tile_n = max(8, min(rows_by_vmem, rows_by_hbm))
    tile_n = int(min(max(tile_n, 8), n_rows_ceil))
    tile_n = max(8, (tile_n // 8) * 8)

    num_row_tiles = pl.cdiv(N, tile_n)
    num_cls_tiles = pl.cdiv(C, tile_c)
    grid = (num_row_tiles, num_cls_tiles)

    kernel = functools.partial(_knn_loss_kernel, n_rows=N, n_cls=C,
                               tile_n=tile_n, tile_c=tile_c)

    partials = pl.pallas_call(
        kernel,
        out_shape=jax.ShapeDtypeStruct((num_row_tiles, 8, 128), jnp.float32),
        grid_spec=pltpu.PrefetchScalarGridSpec(
            num_scalar_prefetch=0,
            grid=grid,
            in_specs=[
                pl.BlockSpec((tile_n, tile_c), lambda i, j: (i, j)),
                pl.BlockSpec((tile_n, 1), lambda i, j: (i, 0)),
            ],
            # Independent per-row-tile outputs -> row axis can be "parallel"
            # (sharded across both TensorCores on v7x).
            out_specs=pl.BlockSpec((1, 8, 128), lambda i, j: (i, 0, 0)),
            scratch_shapes=[pltpu.VMEM((tile_n, 1), jnp.float32),
                            pltpu.VMEM((tile_n, 1), jnp.float32)],
        ),
        compiler_params=pltpu.CompilerParams(
            dimension_semantics=("parallel", "arbitrary"),
            # Explicit scoped-VMEM budget (defaults: 16 MiB v5e / 32 MiB
            # v6e,v7x); block sizing above stays well under this.
            vmem_limit_bytes=40 * 1024 * 1024,
        ),
    )(knn_logits, targets2d)

    # Tiny final reduction in plain JAX: mean of -logp over the batch.
    return -jnp.sum(partials[:, 0, 0]) / jnp.float32(N)


def knn_loss_forward(loss, knn_logits, targets, coeff):
    # Mirrors knnLoss.forward(loss, knn_logits, targets, coeff); see TODO.
    del loss, coeff
    return knn_loss_pallas(knn_logits, targets)


def _reference(knn_logits, targets):
    x = knn_logits.astype(jnp.float32)
    p = x / jnp.sum(x, axis=-1, keepdims=True)
    logp = jnp.maximum(jnp.log(p), -100.0)
    n = knn_logits.shape[0]
    return -jnp.mean(logp[jnp.arange(n), targets])


if __name__ == "__main__":
    key = jax.random.PRNGKey(0)
    k1, k2, k3, k4, k5, k6 = jax.random.split(key, 6)

    dummy_loss = jnp.float32(0.0)   # unused passthrough args (forward signature)
    coeff = jnp.float32(1.0)

    # Case 1: ragged batch (N not a multiple of the row tile), multi row-tile.
    N1, C1 = 70, 37
    logits1 = jax.random.uniform(k1, (N1, C1), jnp.float32, 0.1, 1.0)
    tgt1 = jax.random.randint(k2, (N1,), 0, C1, dtype=jnp.int32)
    out1 = knn_loss_pallas(logits1, tgt1, tile_n=32)
    jax.block_until_ready(out1)
    ref1 = _reference(logits1, tgt1)
    assert jnp.allclose(out1, ref1, atol=1e-4, rtol=1e-4), (out1, ref1)

    # Case 2: class-dim tiling path with a ragged trailing class block.
    N2, C2 = 64, 200
    logits2 = jax.random.uniform(k3, (N2, C2), jnp.float32, 0.1, 1.0)
    tgt2 = jax.random.randint(k4, (N2,), 0, C2, dtype=jnp.int32)
    out2 = knn_loss_pallas(logits2, tgt2, tile_c=128)
    jax.block_until_ready(out2)
    ref2 = _reference(logits2, tgt2)
    assert jnp.allclose(out2, ref2, atol=1e-4, rtol=1e-4), (out2, ref2)

    # Case 3: native bf16 input through the forward() signature, default tiles.
    N3, C3 = 48, 32
    logits3 = jax.random.uniform(k5, (N3, C3), jnp.bfloat16, 0.1, 1.0)
    tgt3 = jax.random.randint(k6, (N3,), 0, C3, dtype=jnp.int32)
    out3 = knn_loss_forward(dummy_loss, logits3, tgt3, coeff)
    jax.block_until_ready(out3)
    ref3 = _reference(logits3, tgt3)
    assert jnp.allclose(out3, ref3, atol=1e-4, rtol=1e-4), (out3, ref3)

    print("KERNEL_OK")
</pallas_src>

<mosaic_0001>
module attributes {stable_mosaic.version = 11 : i64} {
  func.func @_knn_loss_kernel(%arg0: i32, %arg1: i32, %arg2: memref<32x37xf32, #tpu.memory_space<vmem>>, %arg3: memref<32x1xi32, #tpu.memory_space<vmem>>, %arg4: memref<1x8x128xf32, #tpu.memory_space<vmem>>, %arg5: memref<32x1xf32, #tpu.memory_space<vmem>>, %arg6: memref<32x1xf32, #tpu.memory_space<vmem>>) attributes {dimension_semantics = [#tpu.dimension_semantics<parallel>, #tpu.dimension_semantics<arbitrary>], iteration_bounds = array<i64: 3, 1>, scalar_prefetch = 0 : i64, scratch_operands = 2 : i64, tpu.core_type = #tpu.core_type<tc>, window_params = [{transform_indices = @transform_0, window_bounds = array<i64: 32, 37>}, {transform_indices = @transform_1, window_bounds = array<i64: 32, 1>}, {transform_indices = @transform_2, window_bounds = array<i64: 1, 8, 128>}]} {
    %c0_i32 = arith.constant 0 : i32
    %0 = arith.cmpi eq, %arg1, %c0_i32 : i32
    %1 = arith.extui %0 : i1 to i32
    %c0_i32_0 = arith.constant 0 : i32
    %2 = arith.cmpi ne, %1, %c0_i32_0 : i32
    scf.if %2 {
      %cst_16 = arith.constant 0.000000e+00 : f32
      %26 = vector.broadcast %cst_16 : f32 to vector<32x1xf32>
      %c0_17 = arith.constant 0 : index
      %c0_18 = arith.constant 0 : index
      %27 = vector.load %arg5[%c0_17, %c0_18] : memref<32x1xf32, #tpu.memory_space<vmem>>, vector<32x1xf32>
      tpu.vector_store %arg5[%c0_17, %c0_18], %26 {strides = array<i32>} : memref<32x1xf32, #tpu.memory_space<vmem>>, vector<32x1xf32>,
      %cst_19 = arith.constant 0.000000e+00 : f32
      %28 = vector.broadcast %cst_19 : f32 to vector<32x1xf32>
      %c0_20 = arith.constant 0 : index
      %c0_21 = arith.constant 0 : index
      %29 = vector.load %arg6[%c0_20, %c0_21] : memref<32x1xf32, #tpu.memory_space<vmem>>, vector<32x1xf32>
      tpu.vector_store %arg6[%c0_20, %c0_21], %28 {strides = array<i32>} : memref<32x1xf32, #tpu.memory_space<vmem>>, vector<32x1xf32>,
    } else {
    }
    %c0 = arith.constant 0 : index
    %c0_1 = arith.constant 0 : index
    %3 = vector.load %arg2[%c0, %c0_1] : memref<32x37xf32, #tpu.memory_space<vmem>>, vector<32x37xf32>
    %c37_i32 = arith.constant 37 : i32
    %4 = arith.muli %arg1, %c37_i32 : i32
    %5 = tpu.iota {dimensions = array<i32: 1>} : vector<32x37xi32>
    %6 = vector.broadcast %4 : i32 to vector<32x37xi32>
    %7 = arith.addi %6, %5 : vector<32x37xi32>
    %c0_2 = arith.constant 0 : index
    %c0_3 = arith.constant 0 : index
    %8 = vector.load %arg3[%c0_2, %c0_3] : memref<32x1xi32, #tpu.memory_space<vmem>>, vector<32x1xi32>
    %c0_4 = arith.constant 0 : index
    %c0_5 = arith.constant 0 : index
    %9 = vector.load %arg5[%c0_4, %c0_5] : memref<32x1xf32, #tpu.memory_space<vmem>>, vector<32x1xf32>
    %cst = arith.constant dense<0.000000e+00> : vector<32xf32>
    %10 = vector.multi_reduction <add>, %3, %cst [1] : vector<32x37xf32> to vector<32xf32>
    %11 = vector.shape_cast %10 : vector<32xf32> to vector<32x1xf32>
    %12 = arith.addf %9, %11 : vector<32x1xf32>
    %c0_6 = arith.constant 0 : index
    %c0_7 = arith.constant 0 : index
    %13 = vector.load %arg5[%c0_6, %c0_7] : memref<32x1xf32, #tpu.memory_space<vmem>>, vector<32x1xf32>
    tpu.vector_store %arg5[%c0_6, %c0_7], %12 {strides = array<i32>} : memref<32x1xf32, #tpu.memory_space<vmem>>, vector<32x1xf32>,
    %c0_8 = arith.constant 0 : index
    %c0_9 = arith.constant 0 : index
    %14 = vector.load %arg6[%c0_8, %c0_9] : memref<32x1xf32, #tpu.memory_space<vmem>>, vector<32x1xf32>
    %15 = vector.broadcast %8 : vector<32x1xi32> to vector<32x37xi32>
    %16 = arith.cmpi eq, %7, %15 : vector<32x37xi32>
    %cst_10 = arith.constant 0.000000e+00 : f32
    %17 = vector.broadcast %cst_10 : f32 to vector<32x37xf32>
    %18 = arith.select %16, %3, %17 : vector<32x37xi1>, vector<32x37xf32>
    %cst_11 = arith.constant dense<0.000000e+00> : vector<32xf32>
    %19 = vector.multi_reduction <add>, %18, %cst_11 [1] : vector<32x37xf32> to vector<32xf32>
    %20 = vector.shape_cast %19 : vector<32xf32> to vector<32x1xf32>
    %21 = arith.addf %14, %20 : vector<32x1xf32>
    %c0_12 = arith.constant 0 : index
    %c0_13 = arith.constant 0 : index
    %22 = vector.load %arg6[%c0_12, %c0_13] : memref<32x1xf32, #tpu.memory_space<vmem>>, vector<32x1xf32>
    tpu.vector_store %arg6[%c0_12, %c0_13], %21 {strides = array<i32>} : memref<32x1xf32, #tpu.memory_space<vmem>>, vector<32x1xf32>,
    %c0_i32_14 = arith.constant 0 : i32
    %23 = arith.cmpi eq, %arg1, %c0_i32_14 : i32
    %24 = arith.extui %23 : i1 to i32
    %c0_i32_15 = arith.constant 0 : i32
    %25 = arith.cmpi ne, %24, %c0_i32_15 : i32
    scf.if %25 {
      %c0_16 = arith.constant 0 : index
      %c0_17 = arith.constant 0 : index
      %26 = vector.load %arg6[%c0_16, %c0_17] : memref<32x1xf32, #tpu.memory_space<vmem>>, vector<32x1xf32>
      %c0_18 = arith.constant 0 : index
      %c0_19 = arith.constant 0 : index
      %27 = vector.load %arg5[%c0_18, %c0_19] : memref<32x1xf32, #tpu.memory_space<vmem>>, vector<32x1xf32>
      %28 = arith.divf %26, %27 : vector<32x1xf32>
      %29 = math.log %28 : vector<32x1xf32>
      %cst_20 = arith.constant -1.000000e+02 : f32
      %30 = vector.broadcast %cst_20 : f32 to vector<32x1xf32>
      %31 = arith.maximumf %29, %30 : vector<32x1xf32>
      %c32_i32 = arith.constant 32 : i32
      %32 = arith.muli %arg0, %c32_i32 : i32
      %33 = tpu.iota {dimensions = array<i32: 0>} : vector<32x1xi32>
      %34 = vector.broadcast %32 : i32 to vector<32x1xi32>
      %35 = arith.addi %34, %33 : vector<32x1xi32>
      %c70_i32 = arith.constant 70 : i32
      %36 = vector.broadcast %c70_i32 : i32 to vector<32x1xi32>
      %37 = arith.cmpi slt, %35, %36 : vector<32x1xi32>
      %cst_21 = arith.constant 0.000000e+00 : f32
      %38 = vector.broadcast %cst_21 : f32 to vector<32x1xf32>
      %39 = arith.select %37, %31, %38 : vector<32x1xi1>, vector<32x1xf32>
      %cst_22 = arith.constant dense<0.000000e+00> : vector<1xf32>
      %40 = vector.multi_reduction <add>, %39, %cst_22 [0] : vector<32x1xf32> to vector<1xf32>
      %41 = vector.shape_cast %40 : vector<1xf32> to vector<1x1xf32>
      %42 = vector.shape_cast %41 : vector<1x1xf32> to vector<1x1x1xf32>
      %43 = vector.broadcast %42 : vector<1x1x1xf32> to vector<1x8x128xf32>
      %c0_23 = arith.constant 0 : index
      %c0_24 = arith.constant 0 : index
      %c0_25 = arith.constant 0 : index
      %44 = vector.load %arg4[%c0_23, %c0_24, %c0_25] : memref<1x8x128xf32, #tpu.memory_space<vmem>>, vector<1x8x128xf32>
      tpu.vector_store %arg4[%c0_23, %c0_24, %c0_25], %43 {strides = array<i32>} : memref<1x8x128xf32, #tpu.memory_space<vmem>>, vector<1x8x128xf32>,
    } else {
    }
    return
  }
  func.func @transform_0(%arg0: i32, %arg1: i32) -> (i32, i32) {
    %c0_i32 = arith.constant 0 : i32
    return %arg0, %arg1 : i32, i32
  }
  func.func @transform_1(%arg0: i32, %arg1: i32) -> (i32, i32) {
    %c0_i32 = arith.constant 0 : i32
    %c0_i32_0 = arith.constant 0 : i32
    return %arg0, %c0_i32 : i32, i32
  }
  func.func @transform_2(%arg0: i32, %arg1: i32) -> (i32, i32, i32) {
    %c0_i32 = arith.constant 0 : i32
    %c0_i32_0 = arith.constant 0 : i32
    %c0_i32_1 = arith.constant 0 : i32
    return %arg0, %c0_i32, %c0_i32_0 : i32, i32, i32
  }
}

</mosaic_0001>

<llo_original>
// kernel: tpu_custom_call.1
$region0: #{tpu_custom_call.1}
  #allocation0 [shape = 'u32[]', space=smem, size = 0x4, offset = 0x4, fixed_abs, tag = 'smem constant byte address 0x4 - core index']
  #allocation1 [shape = 'u32[144,128]{1,0:T(1,128)}', space=vmem, size = 0x12000, scoped, tag = 'internal scratch']
  #allocation2 [shape = 'f32[32,1]{1,0:T(8,128)}', space=vmem, size = 0x4000, scoped, tag = 'scratch operand']
  #allocation3 [shape = 'f32[32,1]{1,0:T(8,128)}', space=vmem, size = 0x4000, scoped, tag = 'scratch operand']
  %s0 = inlined_call_operand.vmem [shape: f32[70,37], index: 0, kind: input, shape index: {}]
  %s1 = inlined_call_operand.vmem [shape: s32[70,1], index: 1, kind: input, shape index: {}]
  %s2 = inlined_call_operand.hbm [shape: f32[3,8,128], index: 2, kind: output, shape index: {}]
  %s3 = sld [smem:[#allocation0]]
  $region49: #{tpu_custom_call.1} parent=0
    _
  %s5 = ssub.s32 1, %s3
  %s6 = scalar_select 0, %s5, %s3
  $region1: #{tpu_custom_call.1} parent=0
    #allocation4 [shape = 'u8[8192]{0}', space=vmem, size = 0x2000, scoped, tag = 'output window, operand 0']
    #allocation5 [shape = 's32[2]{0}', space=sflag, size = 0x8, scoped, tag = 'scoped memory for tpu_custom_call.1']
    %7 = vsyncpa [#allocation5], 0
    %s8 = scalar_lea.sflag [#allocation5], 1
    %9 = vsyncpa %s8, 0
    loop: start=0, step=1, limit=5
    $region2: #{tpu_custom_call.1} parent=1 // loop_pre_header
      _
    $region3: #{tpu_custom_call.1} parent=1 // loop_header
      %s11 = sphi 0, %s15
      %p12 = scmp.ge.s32.totalorder %s11, 5
      %s18 = sphi 0, %s30
      %s19 = sphi 0, %s26
      %s20 = sphi 0, %s18
      %s21 = sphi 0, %s19
      %s22 = sphi 0, %s20
      %s23 = sphi 0, %s21
      %s35 = sphi 0, %s37
      %s38 = sphi 0, %s35
      %s39 = sphi 0, %s38
      %s55 = sphi 0, %s39
      %s61 = sphi 0, %s63
      %s64 = sphi 0, %s61
      %s65 = sphi 0, %s64
      %s81 = sphi 0, %s65
      %s87 = sphi 0, %s89
      %s90 = sphi 0, %s87
      %s91 = sphi 0, %s90
      %s107 = sphi 0, %s91
    $region4: #{tpu_custom_call.1} parent=1 // loop_header_branch
      %14 = sbr.rel (%p12) target = $region8
    $region5: #{tpu_custom_call.1} parent=1 // loop_body
      %s16 = ssub.s32 %s11, 1
      %s17 = ssub.s32 %s11, 2
      %s24 = sadd.s32 1, %s19
      %p25 = scmp.ge.s32.totalorder %s24, 1
      %s26 = scalar_select %p25, 0, %s24
      %s27 = sadd.s32 1, %s18
      %s28 = scalar_select %p25, %s27, %s18
      %p29 = scmp.ge.s32.totalorder %s28, 3
      %s30 = scalar_select %p29, 0, %s28
      %s31 = ssub.s32 %s18, %s30
      %s32 = ssub.s32 %s19, %s26
      %s33 = sor.u32 %s31, %s32
      %p34 = scmp.eq.s32.totalorder %s33, 0
      %s36 = sadd.s32 %s35, 1
      %s37 = scalar_select %p34, %s35, %s36
      %p40 = pneg %p34
      %p41 = scmp.eq.s32.totalorder %s11, 2
      %p42 = por %p40, %p41
      %p43 = scmp.ne.s32.totalorder %s35, %s38
      %p44 = scmp.eq.s32.totalorder %s11, 0
      %p45 = por %p43, %p44
      %p46 = scmp.ne.s32.totalorder %s35, %s38
      %p47 = scmp.eq.s32.totalorder %s16, 2
      %p48 = por %p46, %p47
      %p49 = scmp.ne.s32.totalorder %s38, %s39
      %p50 = scmp.eq.s32.totalorder %s16, 0
      %p51 = por %p49, %p50
      %p52 = scmp.ne.s32.totalorder %s38, %s39
      %p53 = scmp.eq.s32.totalorder %s17, 2
      %p54 = por %p52, %p53
      %p56 = scmp.ne.s32.totalorder %s39, %s55
      %p57 = scmp.eq.s32.totalorder %s17, 0
      %p58 = por %p56, %p57
      %s59 = ssub.s32 %s18, %s30
      %p60 = scmp.eq.s32.totalorder %s59, 0
      %s62 = sadd.s32 %s61, 1
      %s63 = scalar_select %p60, %s61, %s62
      %p66 = pneg %p60
      %p67 = scmp.eq.s32.totalorder %s11, 2
      %p68 = por %p66, %p67
      %p69 = scmp.ne.s32.totalorder %s61, %s64
      %p70 = scmp.eq.s32.totalorder %s11, 0
      %p71 = por %p69, %p70
      %p72 = scmp.ne.s32.totalorder %s61, %s64
      %p73 = scmp.eq.s32.totalorder %s16, 2
      %p74 = por %p72, %p73
      %p75 = scmp.ne.s32.totalorder %s64, %s65
      %p76 = scmp.eq.s32.totalorder %s16, 0
      %p77 = por %p75, %p76
      %p78 = scmp.ne.s32.totalorder %s64, %s65
      %p79 = scmp.eq.s32.totalorder %s17, 2
      %p80 = por %p78, %p79
      %p82 = scmp.ne.s32.totalorder %s65, %s81
      %p83 = scmp.eq.s32.totalorder %s17, 0
      %p84 = por %p82, %p83
      %s85 = ssub.s32 %s18, %s30
      %p86 = scmp.eq.s32.totalorder %s85, 0
      %s88 = sadd.s32 %s87, 1
      %s89 = scalar_select %p86, %s87, %s88
      %p92 = pneg %p86
      %p93 = scmp.eq.s32.totalorder %s11, 2
      %p94 = por %p92, %p93
      %p95 = scmp.ne.s32.totalorder %s87, %s90
      %p96 = scmp.eq.s32.totalorder %s11, 0
      %p97 = por %p95, %p96
      %p98 = scmp.ne.s32.totalorder %s87, %s90
      %p99 = scmp.eq.s32.totalorder %s16, 2
      %p100 = por %p98, %p99
      %p101 = scmp.ne.s32.totalorder %s90, %s91
      %p102 = scmp.eq.s32.totalorder %s16, 0
      %p103 = por %p101, %p102
      %p104 = scmp.ne.s32.totalorder %s90, %s91
      %p105 = scmp.eq.s32.totalorder %s17, 2
      %p106 = por %p104, %p105
      %p108 = scmp.ne.s32.totalorder %s91, %s107
      %p109 = scmp.eq.s32.totalorder %s17, 0
      %p110 = por %p108, %p109
      %p111 = scmp.le.s32.totalorder 1, %s11
      %p112 = scmp.lt.s32.totalorder %s11, 4
      %p113 = pnand %p111, %p112
      %p114 = pneg %p113
      // Predicated region
      $region9: #{tpu_custom_call.1} parent=5 // pred_check
        _
      $region10: #{tpu_custom_call.1} parent=5 // pred_check_branch
        %116 = sbr.rel (%p113) target = $region12
      $region11: #{tpu_custom_call.1} parent=5 // pred_region
        %s117 = ssub.s32 %s11, 1
      $region12: #{tpu_custom_call.1} parent=5 // pred_fallthru
        _
      %p118 = scmp.lt.s32.totalorder %s11, 3
      // Predicated region
      $region13: #{tpu_custom_call.1} parent=5 // pred_check
        %p119 = pneg %p118
      $region14: #{tpu_custom_call.1} parent=5 // pred_check_branch
        %121 = sbr.rel (%p119) target = $region16
      $region15: #{tpu_custom_call.1} parent=5 // pred_region
        // Predicated region
        $region17: #{tpu_custom_call.1} parent=15 // pred_check
          %p122 = pneg %p45
        $region18: #{tpu_custom_call.1} parent=15 // pred_check_branch
          %124 = sbr.rel (%p122) target = $region20
        $region19: #{tpu_custom_call.1} parent=15 // pred_region
          %s125 = smul.u32 4, %s18
          %s126 = ssub.s32 9, %s125
          %p127 = scmp.lt.s32.totalorder %s126, 4
          %s128 = scalar_select %p127, %s126, 4
          %s129 = smul.u32 128, %s128
          %p130 = scmp.lt.s32.totalorder %s125, 8
          %s131 = scalar_select %p130, %s125, 8
          %p132 = scmp.lt.s32.totalorder %s19, 0
          %s133 = scalar_select %p132, %s19, 0
          %s134 = sadd.s32 %s133, %s131
          %s135 = smul.addr %s134, 8
          %s136 = scalar_lea.vmem %s0, %s135
          %s137 = smul.u32 4, %s18
          %s138 = ssub.s32 9, %s137
          %p139 = scmp.lt.s32.totalorder %s138, 4
          %s140 = scalar_select %p139, %s138, 4
          %s141 = smul.u32 128, %s140
        $region20: #{tpu_custom_call.1} parent=15 // pred_fallthru
          _
        // Predicated region
        $region21: #{tpu_custom_call.1} parent=15 // pred_check
          %p142 = pneg %p71
        $region22: #{tpu_custom_call.1} parent=15 // pred_check_branch
          %144 = sbr.rel (%p142) target = $region24
        $region23: #{tpu_custom_call.1} parent=15 // pred_region
          %s145 = smul.u32 4, %s18
          %s146 = ssub.s32 9, %s145
          %p147 = scmp.lt.s32.totalorder %s146, 4
          %s148 = scalar_select %p147, %s146, 4
          %s149 = smul.u32 128, %s148
          %p150 = scmp.lt.s32.totalorder %s145, 8
          %s151 = scalar_select %p150, %s145, 8
          %s152 = smul.addr %s151, 8
          %s153 = scalar_lea.vmem %s1, %s152
          %s154 = smul.u32 4, %s18
          %s155 = ssub.s32 9, %s154
          %p156 = scmp.lt.s32.totalorder %s155, 4
          %s157 = scalar_select %p156, %s155, 4
          %s158 = smul.u32 128, %s157
        $region24: #{tpu_custom_call.1} parent=15 // pred_fallthru
          _
      $region16: #{tpu_custom_call.1} parent=5 // pred_fallthru
        _
      %p159 = scmp.le.s32.totalorder 1, %s11
      %p160 = scmp.lt.s32.totalorder %s11, 4
      %p161 = pnand %p159, %p160
      %p162 = pneg %p161
      // Predicated region
      $region25: #{tpu_custom_call.1} parent=5 // pred_check
        _
      $region26: #{tpu_custom_call.1} parent=5 // pred_check_branch
        %164 = sbr.rel (%p161) target = $region28
      $region27: #{tpu_custom_call.1} parent=5 // pred_region
        %s165 = ssub.s32 %s11, 1
        %s166 = smul.u32 4, %s20
        %s167 = ssub.s32 9, %s166
        %p168 = scmp.lt.s32.totalorder %s167, 4
        %s169 = scalar_select %p168, %s167, 4
        %s170 = smul.u32 128, %s169
        %p171 = scmp.lt.s32.totalorder %s166, 8
        %s172 = scalar_select %p171, %s166, 8
        %p173 = scmp.lt.s32.totalorder %s21, 0
        %s174 = scalar_select %p173, %s21, 0
        %s175 = sadd.s32 %s174, %s172
        %s176 = smul.addr %s175, 8
        %s177 = scalar_lea.vmem %s0, %s176
        %p178 = pneg %p51
        %p179 = pneg %p48
        %s180 = smul.u32 4, %s20
        %s181 = ssub.s32 9, %s180
        %p182 = scmp.lt.s32.totalorder %s181, 4
        %s183 = scalar_select %p182, %s181, 4
        %s184 = smul.u32 128, %s183
        %p185 = scmp.lt.s32.totalorder %s180, 8
        %s186 = scalar_select %p185, %s180, 8
        %s187 = smul.addr %s186, 8
        %s188 = scalar_lea.vmem %s1, %s187
        %p189 = pneg %p77
        %p190 = pneg %p74
        %p191 = pneg %p103
        %p192 = pneg %p100
        %s193 = sand.u32 %s90, 1
        %s194 = scalar_lea.sflag [#allocation5], %s193
        %s195 = sand.u32 %s90, 1
        %s196 = smul.addr %s195, 8
        %s197 = scalar_lea.vmem [#allocation4], %s196
        %s198 = smul.u32 4, %s20
        %s199 = ssub.s32 9, %s198
        %p200 = scmp.lt.s32.totalorder %s199, 4
        %s201 = scalar_select %p200, %s199, 4
        %s202 = smul.u32 128, %s201
        %p203 = scmp.lt.s32.totalorder %s198, 8
        %s204 = scalar_select %p203, %s198, 8
        %p205 = scmp.lt.s32.totalorder %s21, 0
        %s206 = scalar_select %p205, %s21, 0
        %s207 = sadd.s32 %s206, %s204
        %s208 = smul.addr %s207, 8
        %s209 = scalar_lea.vmem %s0, %s208
        %s210 = smul.u32 4, %s20
        %s211 = ssub.s32 9, %s210
        %p212 = scmp.lt.s32.totalorder %s211, 4
        %s213 = scalar_select %p212, %s211, 4
        %s214 = smul.u32 128, %s213
        %s215 = smul.u32 4, %s20
        %s216 = ssub.s32 9, %s215
        %p217 = scmp.lt.s32.totalorder %s216, 4
        %s218 = scalar_select %p217, %s216, 4
        %s219 = smul.u32 128, %s218
        %p220 = scmp.lt.s32.totalorder %s215, 8
        %s221 = scalar_select %p220, %s215, 8
        %s222 = smul.addr %s221, 8
        %s223 = scalar_lea.vmem %s1, %s222
        %s224 = smul.u32 4, %s20
        %s225 = ssub.s32 9, %s224
        %p226 = scmp.lt.s32.totalorder %s225, 4
        %s227 = scalar_select %p226, %s225, 4
        %s228 = smul.u32 128, %s227
        %p229 = scmp.eq.s32.totalorder %s21, 0
        // Predicated region
        $region29: #{tpu_custom_call.1} parent=27 // pred_check
          %p230 = pneg %p229
        $region30: #{tpu_custom_call.1} parent=27 // pred_check_branch
          %232 = sbr.rel (%p230) target = $region32
        $region31: #{tpu_custom_call.1} parent=27 // pred_region
          %vm233 = vcmask 7168
          %234 = vst.msk [vmem:[#allocation2] sm:$0xff] %vm233, 0.0
          %235 = vst.msk [vmem:[#allocation2 + $0x8] sm:$0xff] %vm233, 0.0
          %236 = vst.msk [vmem:[#allocation2 + $0x10] sm:$0xff] %vm233, 0.0
          %237 = vst.msk [vmem:[#allocation2 + $0x18] sm:$0xff] %vm233, 0.0
          %238 = vst.msk [vmem:[#allocation3] sm:$0xff] %vm233, 0.0
          %239 = vst.msk [vmem:[#allocation3 + $0x8] sm:$0xff] %vm233, 0.0
          %240 = vst.msk [vmem:[#allocation3 + $0x10] sm:$0xff] %vm233, 0.0
          %241 = vst.msk [vmem:[#allocation3 + $0x18] sm:$0xff] %vm233, 0.0
        $region32: #{tpu_custom_call.1} parent=27 // pred_fallthru
          _
        %v242 = vld [vmem:[%s209] sm:$0xff]
        %v243 = vld [vmem:[%s209 + $0x8] sm:$0xff]
        %v244 = vld [vmem:[%s209 + $0x10] sm:$0xff]
        %v245 = vld [vmem:[%s209 + $0x18] sm:$0xff]
        %s246 = smul.u32 %s21, 37
        %v247 = vlaneseq
        %v248 = vand.u32 %v247, 127
        %v249 = vstv %s246
        %v250 = vadd.s32 %v249, %v248
        %v251 = vld [vmem:[%s223] sm:$0xff]
        %v252 = vld [vmem:[%s223 + $0x8] sm:$0xff]
        %v253 = vld [vmem:[%s223 + $0x10] sm:$0xff]
        %v254 = vld [vmem:[%s223 + $0x18] sm:$0xff]
        %v255 = vld [vmem:[#allocation2] sm:$0xff]
        %v256 = vld [vmem:[#allocation2 + $0x8] sm:$0xff]
        %v257 = vld [vmem:[#allocation2 + $0x10] sm:$0xff]
        %v258 = vld [vmem:[#allocation2 + $0x18] sm:$0xff]
        %vm259 = vcmask 302080
        %v260 = vsel %vm259, %v242, 0.0
        %261 = vadd.xlane.f32.xlu0 %v260
        %v262 = vpop.xlane.xlu0 %261
        %v263 = vsel %vm259, %v243, 0.0
        %264 = vadd.xlane.f32.xlu0 %v263
        %v265 = vpop.xlane.xlu0 %264
        %v266 = vsel %vm259, %v244, 0.0
        %267 = vadd.xlane.f32.xlu0 %v266
        %v268 = vpop.xlane.xlu0 %267
        %v269 = vsel %vm259, %v245, 0.0
        %270 = vadd.xlane.f32.xlu0 %v269
        %v271 = vpop.xlane.xlu0 %270
        %v272 = vadd.f32 %v255, %v262
        %v273 = vadd.f32 %v256, %v265
        %v274 = vadd.f32 %v257, %v268
        %v275 = vadd.f32 %v258, %v271
        %vm276 = vcmask 7168
        %277 = vst.msk [vmem:[#allocation2] sm:$0xff] %vm276, %v272
        %278 = vst.msk [vmem:[#allocation2 + $0x8] sm:$0xff] %vm276, %v273
        %279 = vst.msk [vmem:[#allocation2 + $0x10] sm:$0xff] %vm276, %v274
        %280 = vst.msk [vmem:[#allocation2 + $0x18] sm:$0xff] %vm276, %v275
        %v281 = vld [vmem:[#allocation3] sm:$0xff]
        %v282 = vld [vmem:[#allocation3 + $0x8] sm:$0xff]
        %v283 = vld [vmem:[#allocation3 + $0x10] sm:$0xff]
        %v284 = vld [vmem:[#allocation3 + $0x18] sm:$0xff]
        %285 = vset.pattern.permute.xlu0 0
        %286 = vperm.xlu0 %285, %v251
        %v287 = vpop.permute.xlu0 %286
        %288 = vset.pattern.permute.xlu0 0
        %289 = vperm.xlu0 %288, %v252
        %v290 = vpop.permute.xlu0 %289
        %291 = vset.pattern.permute.xlu0 0
        %292 = vperm.xlu0 %291, %v253
        %v293 = vpop.permute.xlu0 %292
        %294 = vset.pattern.permute.xlu0 0
        %295 = vperm.xlu0 %294, %v254
        %v296 = vpop.permute.xlu0 %295
        %vm297 = vcmp.eq.s32.totalorder %v250, %v287
        %vm298 = vcmp.eq.s32.totalorder %v250, %v290
        %vm299 = vcmp.eq.s32.totalorder %v250, %v293
        %vm300 = vcmp.eq.s32.totalorder %v250, %v296
        %v301 = vsel %vm297, %v242, 0.0
        %v302 = vsel %vm298, %v243, 0.0
        %v303 = vsel %vm299, %v244, 0.0
        %v304 = vsel %vm300, %v245, 0.0
        %v305 = vsel %vm259, %v301, 0.0
        %306 = vadd.xlane.f32.xlu0 %v305
        %v307 = vpop.xlane.xlu0 %306
        %v308 = vsel %vm259, %v302, 0.0
        %309 = vadd.xlane.f32.xlu0 %v308
        %v310 = vpop.xlane.xlu0 %309
        %v311 = vsel %vm259, %v303, 0.0
        %312 = vadd.xlane.f32.xlu0 %v311
        %v313 = vpop.xlane.xlu0 %312
        %v314 = vsel %vm259, %v304, 0.0
        %315 = vadd.xlane.f32.xlu0 %v314
        %v316 = vpop.xlane.xlu0 %315
        %v317 = vadd.f32 %v281, %v307
        %v318 = vadd.f32 %v282, %v310
        %v319 = vadd.f32 %v283, %v313
        %v320 = vadd.f32 %v284, %v316
        %321 = vst.msk [vmem:[#allocation3] sm:$0xff] %vm276, %v317
        %322 = vst.msk [vmem:[#allocation3 + $0x8] sm:$0xff] %vm276, %v318
        %323 = vst.msk [vmem:[#allocation3 + $0x10] sm:$0xff] %vm276, %v319
        %324 = vst.msk [vmem:[#allocation3 + $0x18] sm:$0xff] %vm276, %v320
        // Predicated region
        $region33: #{tpu_custom_call.1} parent=27 // pred_check
          %p325 = pneg %p229
        $region34: #{tpu_custom_call.1} parent=27 // pred_check_branch
          %327 = sbr.rel (%p325) target = $region36
        $region35: #{tpu_custom_call.1} parent=27 // pred_region
          %v328 = vld [vmem:[#allocation3] sm:$0xff]
          %v329 = vld [vmem:[#allocation3 + $0x8] sm:$0xff]
          %v330 = vld [vmem:[#allocation3 + $0x10] sm:$0xff]
          %v331 = vld [vmem:[#allocation3 + $0x18] sm:$0xff]
          %v332 = vld [vmem:[#allocation2] sm:$0xff]
          %v333 = vld [vmem:[#allocation2 + $0x8] sm:$0xff]
          %v334 = vld [vmem:[#allocation2 + $0x10] sm:$0xff]
          %v335 = vld [vmem:[#allocation2 + $0x18] sm:$0xff]
          %v336 = vrcp.pop %v332
          %v337 = vmul.f32 %v328, %v336
          %v338 = vrcp.pop %v333
          %v339 = vmul.f32 %v329, %v338
          %v340 = vrcp.pop %v334
          %v341 = vmul.f32 %v330, %v340
          %v342 = vrcp.pop %v335
          %v343 = vmul.f32 %v331, %v342
          %v344 = vlog2.pop %v337
          %v345 = vmul.f32 %v344, 0.6931472
          %v346 = vlog2.pop %v339
          %v347 = vmul.f32 %v346, 0.6931472
          %v348 = vlog2.pop %v341
          %v349 = vmul.f32 %v348, 0.6931472
          %v350 = vlog2.pop %v343
          %v351 = vmul.f32 %v350, 0.6931472
          %v352 = vmax.f32 %v345, -100.0
          %v353 = vmax.f32 %v347, -100.0
          %v354 = vmax.f32 %v349, -100.0
          %v355 = vmax.f32 %v351, -100.0
          %s356 = smul.u32 %s20, 32
          %v357 = vlaneseq
          %v358 = vshrl.u32 %v357, 7
          %v359 = vadd.s32 %v358, 8
          %v360 = vadd.s32 %v358, 16
          %v361 = vadd.s32 %v358, 24
          %v362 = vstv %s356
          %v363 = vadd.s32 %v362, %v358
          %v364 = vadd.s32 %v362, %v359
          %v365 = vadd.s32 %v362, %v360
          %v366 = vadd.s32 %v362, %v361
          %vm367 = vcmp.lt.s32.totalorder %v363, 70
          %vm368 = vcmp.lt.s32.totalorder %v364, 70
          %vm369 = vcmp.lt.s32.totalorder %v365, 70
          %vm370 = vcmp.lt.s32.totalorder %v366, 70
          %v371 = vsel %vm367, %v352, 0.0
          %v372 = vsel %vm368, %v353, 0.0
          %v373 = vsel %vm369, %v354, 0.0
          %v374 = vsel %vm370, %v355, 0.0
          %v375 = vsel %vm276, %v371, 0.0
          %v376 = vsel %vm276, %v372, 0.0
          %v377 = vadd.f32 %v375, %v376
          %v378 = vsel %vm276, %v373, 0.0
          %v379 = vadd.f32 %v377, %v378
          %v380 = vsel %vm276, %v374, 0.0
          %v381 = vadd.f32 %v379, %v380
          %v382 = vrot.slane %v381, 4
          %v383 = vadd.f32 %v381, %v382
          %v384 = vrot.slane %v383, 2
          %v385 = vadd.f32 %v383, %v384
          %v386 = vrot.slane %v385, 1
          %v387 = vadd.f32 %v385, %v386
          %389 = vset.pattern.permute.xlu0 0
          %390 = vperm.xlu0 %389, %v387
          %v391 = vpop.permute.xlu0 %390
          %393 = vst [vmem:[%s197] sm:$0xff] %v391
        $region36: #{tpu_custom_call.1} parent=27 // pred_fallthru
          _
        %s394 = sand.u32 %s90, 1
        %s395 = scalar_lea.sflag [#allocation5], %s394
        %s396 = sand.u32 %s90, 1
        %s397 = smul.addr %s396, 8
        %s398 = scalar_lea.vmem [#allocation4], %s397
        // Predicated region
        $region37: #{tpu_custom_call.1} parent=27 // pred_check
          %p399 = pneg %p100
        $region38: #{tpu_custom_call.1} parent=27 // pred_check_branch
          %401 = sbr.rel (%p399) target = $region40
        $region39: #{tpu_custom_call.1} parent=27 // pred_region
          %s403 = ssub.s32 128, 128
          %404 = vsyncadd %s395, %s403
          %s405 = smul.addr %s20, 128
          %s406 = scalar_lea.hbm %s2, %s405
          %s408 = sshll.u32 %s398, 4
          %s409 = int_to_ptr.vmem [resolvable:$true] %s408
          %411 = dma.vmem_to_hbm [thread:$0]  %s409, 128, %s406, %s395
        $region40: #{tpu_custom_call.1} parent=27 // pred_fallthru
          _
      $region28: #{tpu_custom_call.1} parent=5 // pred_fallthru
        _
      %p412 = scmp.le.s32.totalorder 2, %s11
      // Predicated region
      $region41: #{tpu_custom_call.1} parent=5 // pred_check
        %p413 = pneg %p412
      $region42: #{tpu_custom_call.1} parent=5 // pred_check_branch
        %415 = sbr.rel (%p413) target = $region44
      $region43: #{tpu_custom_call.1} parent=5 // pred_region
        %s416 = ssub.s32 %s11, 2
        // Predicated region
        $region45: #{tpu_custom_call.1} parent=43 // pred_check
          %p417 = pneg %p106
        $region46: #{tpu_custom_call.1} parent=43 // pred_check_branch
          %419 = sbr.rel (%p417) target = $region48
        $region47: #{tpu_custom_call.1} parent=43 // pred_region
          %s420 = sand.u32 %s91, 1
          %s421 = scalar_lea.sflag [#allocation5], %s420
          %s422 = sand.u32 %s91, 1
          %s423 = smul.addr %s422, 8
          %s424 = scalar_lea.vmem [#allocation4], %s423
          %425 = dma.done %s421, 128
        $region48: #{tpu_custom_call.1} parent=43 // pred_fallthru
          _
      $region44: #{tpu_custom_call.1} parent=5 // pred_fallthru
        _
    $region6: #{tpu_custom_call.1} parent=1 // loop_footer
      %s15 = sadd.s32 1, %s11
    $region7: #{tpu_custom_call.1} parent=1 // loop_footer_branch
      %10 = sbr.rel target = $region3
    $region8: #{tpu_custom_call.1} parent=1 // loop_exit
      _
    %426 = vsyncpa [#allocation5], 1
    %s427 = scalar_lea.sflag [#allocation5], 1
    %428 = vsyncpa %s427, 1

</llo_original>
